<compile_context>
chip_gen: v5e
topology: v5e:2x2
jax: 0.10.0
libtpu: 0.0.40
codegen_flags: <defaults>
</compile_context>

<pallas_src>
import jax
import jax.numpy as jnp
from jax.experimental import pallas as pl
from jax.experimental.pallas import tpu as pltpu


def _round_up(x, m):
    return (x + m - 1) // m * m


# ----------------------------------------------------------------------------------
# Pass 1: per-edge messages, computed exactly once.
#   msg[t, e, :] = relu(xe[t, e, :] @ w1[t] + b1[t]) @ (w2[t] @ W_out) + b2[t] @ W_out
# ----------------------------------------------------------------------------------
def _msg_kernel(xe_ref, w1_ref, b1_ref, w2_ref, b2_ref, msg_ref):
    # xe_ref : (1, te, 2*in)  bf16
    # w1_ref : (1, 2*in, hid_p) bf16 ; b1_ref : (1, 1, hid_p) f32
    # w2_ref : (1, hid_p, out_p) bf16 (W_out folded) ; b2_ref : (1, 1, out_p) f32 (folded)
    # msg_ref: (1, te, out_p) bf16
    h = jnp.dot(xe_ref[0], w1_ref[0], preferred_element_type=jnp.float32) + b1_ref[0]
    h = jnp.maximum(h, 0.0)
    m = jnp.dot(h.astype(jnp.bfloat16), w2_ref[0],
                preferred_element_type=jnp.float32) + b2_ref[0]
    msg_ref[0] = m.astype(msg_ref.dtype)


# ----------------------------------------------------------------------------------
# Pass 2: scatter-add messages to destination nodes + fused skip projection.
#   out[n, :] = x[n, :] @ W_skip + (b_out + b_skip) + sum_{edges e: dst(e)==n} msg[e, :]
# ----------------------------------------------------------------------------------
def _scatter_kernel(msg_ref, dst_ref, x_ref, wskip_ref, be_ref, out_ref):
    # msg_ref  : (te, out_p) bf16      (flattened over edge types)
    # dst_ref  : (1, te)     int32     (-1 for padded edges)
    # x_ref    : (tn, in)    bf16      (skip path)
    # wskip_ref: (in, out_p) bf16 ; be_ref: (1, out_p) f32 (b_out + b_skip fused)
    # out_ref  : (tn, out_p) f32       resident accumulator across the edge-tile axis
    n = pl.program_id(0)
    e = pl.program_id(1)
    tn = out_ref.shape[0]
    te = msg_ref.shape[0]

    # First edge tile for this node tile: initialise with skip projection + fused biases.
    @pl.when(e == 0)
    def _():
        out_ref[...] = (
            jnp.dot(x_ref[...], wskip_ref[...], preferred_element_type=jnp.float32)
            + be_ref[...]
        )

    # Cheap on-chip one-hot: shift dst by the tile base once, compare against a sublane
    # iota, cast the bool straight to the MXU operand dtype (bf16, exact for 0/1).
    local_dst = dst_ref[...] - n * tn                                  # (1, te)
    rows = jax.lax.broadcasted_iota(jnp.int32, (tn, te), 0)            # (tn, te)
    onehot = (rows == local_dst).astype(jnp.bfloat16)                  # (tn, te)

    out_ref[...] += jnp.dot(onehot, msg_ref[...], preferred_element_type=jnp.float32)


def gnn_layer_forward(features, src_idx, dst_idx, params, *, tn=256, te=2048):
    """features: (N, in) f32; src_idx/dst_idx: (T, E) int32 edge endpoints per edge type."""
    N, in_feats = features.shape
    T, E = src_idx.shape
    hid = params["w1"].shape[-1]
    out_feats = params["w2"].shape[-1]

    hid_p = _round_up(hid, 128)
    out_p = _round_up(out_feats, 128)

    # Edge tiling (shared by both passes so the flattened edge axis stays divisible).
    te = min(te, _round_up(E, 128))
    e_pad = _round_up(E, te)

    # Node tiling: guarantee >=2 node tiles when possible so the 'parallel' node axis can
    # shard across the two TensorCores on v7x.
    if N <= tn:
        tn = max(8, _round_up(-(-N // 2), 8))
    n_pad = _round_up(N, tn)

    # ---- JAX glue (gather + weight folding + padding) ---------------------------------
    feat_bf16 = features.astype(jnp.bfloat16)
    xe = jnp.concatenate([feat_bf16[src_idx], feat_bf16[dst_idx]], axis=-1)   # (T, E, 2*in)
    xe = jnp.pad(xe, ((0, 0), (0, e_pad - E), (0, 0)))
    # Padded edges get dst=-1 so they never match a real node row in the scatter.
    dst = jnp.pad(dst_idx.astype(jnp.int32), ((0, 0), (0, e_pad - E)),
                  constant_values=-1)
    dst_flat = dst.reshape(1, T * e_pad)

    # Fold W_out into the per-type MLP and fuse the output/skip biases.
    # (Changes fp accumulation order slightly vs the reference; documented trade-off.)
    w2f = jnp.einsum("tho,op->thp", params["w2"], params["w_out"])            # (T, hid, out)
    b2f = jnp.einsum("to,op->tp", params["b2"], params["w_out"])              # (T, out)
    be = (params["b_out"] + params["b_skip"]).reshape(1, out_feats)

    def pad_to(a, shape):
        return jnp.pad(a, [(0, s - d) for d, s in zip(a.shape, shape)])

    w1 = pad_to(params["w1"], (T, 2 * in_feats, hid_p)).astype(jnp.bfloat16)
    b1 = pad_to(params["b1"].reshape(T, 1, hid), (T, 1, hid_p)).astype(jnp.float32)
    w2f = pad_to(w2f, (T, hid_p, out_p)).astype(jnp.bfloat16)
    b2f = pad_to(b2f.reshape(T, 1, out_feats), (T, 1, out_p)).astype(jnp.float32)
    wskip = pad_to(params["w_skip"], (in_feats, out_p)).astype(jnp.bfloat16)
    be = pad_to(be, (1, out_p)).astype(jnp.float32)
    x = pad_to(feat_bf16, (n_pad, in_feats))

    # ---- Pass 1: per-edge messages (pure GEMM, computed once) -------------------------
    msg = pl.pallas_call(
        _msg_kernel,
        out_shape=jax.ShapeDtypeStruct((T, e_pad, out_p), jnp.bfloat16),
        grid_spec=pltpu.PrefetchScalarGridSpec(
            num_scalar_prefetch=0,
            grid=(T, e_pad // te),
            in_specs=[
                pl.BlockSpec((1, te, 2 * in_feats), lambda t, e: (t, e, 0)),   # xe
                pl.BlockSpec((1, 2 * in_feats, hid_p), lambda t, e: (t, 0, 0)),  # w1
                pl.BlockSpec((1, 1, hid_p), lambda t, e: (t, 0, 0)),           # b1
                pl.BlockSpec((1, hid_p, out_p), lambda t, e: (t, 0, 0)),       # w2' (folded)
                pl.BlockSpec((1, 1, out_p), lambda t, e: (t, 0, 0)),           # b2' (folded)
            ],
            out_specs=pl.BlockSpec((1, te, out_p), lambda t, e: (t, e, 0)),
        ),
        compiler_params=pltpu.CompilerParams(
            dimension_semantics=("parallel", "parallel"),
        ),
    )(xe, w1, b1, w2f, b2f)

    msg_flat = msg.reshape(T * e_pad, out_p)
    n_edge_tiles = (T * e_pad) // te

    # ---- Pass 2: scatter-add + skip projection -----------------------------------------
    out = pl.pallas_call(
        _scatter_kernel,
        out_shape=jax.ShapeDtypeStruct((n_pad, out_p), jnp.float32),
        grid_spec=pltpu.PrefetchScalarGridSpec(
            num_scalar_prefetch=0,
            grid=(n_pad // tn, n_edge_tiles),
            in_specs=[
                pl.BlockSpec((te, out_p), lambda n, e: (e, 0)),                # msg (flat)
                pl.BlockSpec((1, te), lambda n, e: (0, e)),                    # dst ids
                pl.BlockSpec((tn, in_feats), lambda n, e: (n, 0)),             # x (skip)
                pl.BlockSpec((in_feats, out_p), lambda n, e: (0, 0)),          # w_skip
                pl.BlockSpec((1, out_p), lambda n, e: (0, 0)),                 # b_out+b_skip
            ],
            out_specs=pl.BlockSpec((tn, out_p), lambda n, e: (n, 0)),
        ),
        compiler_params=pltpu.CompilerParams(
            dimension_semantics=("parallel", "arbitrary"),
        ),
    )(msg_flat, dst_flat, x, wskip, be)

    # Padded rows/cols (init'd with the fused bias, not zero) are sliced off here —
    # keep this slice mandatory.
    return out[:N, :out_feats]


def gnn_layer_reference(features, src_idx, dst_idx, params):
    """Pure-JAX f32 reference matching the PyTorch module semantics."""
    N = features.shape[0]
    T = src_idx.shape[0]
    out_feats = params["w2"].shape[-1]
    acc = jnp.zeros((N, out_feats), jnp.float32)
    for t in range(T):
        xe = jnp.concatenate([features[src_idx[t]], features[dst_idx[t]]], axis=-1)
        h = jax.nn.relu(xe @ params["w1"][t] + params["b1"][t])
        msg = h @ params["w2"][t] + params["b2"][t]
        acc = acc + jax.ops.segment_sum(msg, dst_idx[t], num_segments=N)
    return (acc @ params["w_out"] + params["b_out"]
            + features @ params["w_skip"] + params["b_skip"])


def init_params(key, in_feats, out_feats, hid, num_etypes):
    ks = jax.random.split(key, 8)
    scale = lambda fan_in: 1.0 / jnp.sqrt(jnp.float32(fan_in))
    return {
        "w1": jax.random.normal(ks[0], (num_etypes, 2 * in_feats, hid), jnp.float32) * scale(2 * in_feats),
        "b1": jax.random.normal(ks[1], (num_etypes, hid), jnp.float32) * 0.01,
        "w2": jax.random.normal(ks[2], (num_etypes, hid, out_feats), jnp.float32) * scale(hid),
        "b2": jax.random.normal(ks[3], (num_etypes, out_feats), jnp.float32) * 0.01,
        "w_out": jax.random.normal(ks[4], (out_feats, out_feats), jnp.float32) * scale(out_feats),
        "b_out": jax.random.normal(ks[5], (out_feats,), jnp.float32) * 0.01,
        "w_skip": jax.random.normal(ks[6], (in_feats, out_feats), jnp.float32) * scale(in_feats),
        "b_skip": jax.random.normal(ks[7], (out_feats,), jnp.float32) * 0.01,
    }


if __name__ == "__main__":
    N, IN_FEATS, OUT_FEATS, MLP3_DIM = 32, 16, 32, 64
    NUM_ETYPES, E = 3, 64   # e.g. amazon: ['u-p-u', 'u-s-u', 'u-v-u']

    key = jax.random.PRNGKey(0)
    k_feat, k_src, k_dst, k_par = jax.random.split(key, 4)

    features = jax.random.normal(k_feat, (N, IN_FEATS), jnp.float32)
    src_idx = jax.random.randint(k_src, (NUM_ETYPES, E), 0, N, dtype=jnp.int32)
    dst_idx = jax.random.randint(k_dst, (NUM_ETYPES, E), 0, N, dtype=jnp.int32)
    params = init_params(k_par, IN_FEATS, OUT_FEATS, MLP3_DIM, NUM_ETYPES)

    out = gnn_layer_forward(features, src_idx, dst_idx, params)
    out = jax.block_until_ready(out)

    ref = gnn_layer_reference(features, src_idx, dst_idx, params)
    assert out.shape == (N, OUT_FEATS)

    # bf16 MXU operands vs the pure-f32 reference: allow a bf16-scale tolerance.
    err = float(jnp.max(jnp.abs(out - ref)))
    scale = float(jnp.max(jnp.abs(ref)))
    assert err <= 2e-2 * scale + 2e-2, f"max_abs_err={err}, ref_scale={scale}"

    print("KERNEL_OK")
</pallas_src>

<mosaic_0001>
module attributes {stable_mosaic.version = 11 : i64} {
  func.func @_msg_kernel(%arg0: i32, %arg1: i32, %arg2: memref<1x128x32xbf16, #tpu.memory_space<vmem>>, %arg3: memref<1x32x128xbf16, #tpu.memory_space<vmem>>, %arg4: memref<1x1x128xf32, #tpu.memory_space<vmem>>, %arg5: memref<1x128x128xbf16, #tpu.memory_space<vmem>>, %arg6: memref<1x1x128xf32, #tpu.memory_space<vmem>>, %arg7: memref<1x128x128xbf16, #tpu.memory_space<vmem>>) attributes {dimension_semantics = [#tpu.dimension_semantics<parallel>, #tpu.dimension_semantics<parallel>], iteration_bounds = array<i64: 3, 1>, scalar_prefetch = 0 : i64, scratch_operands = 0 : i64, tpu.core_type = #tpu.core_type<tc>, window_params = [{transform_indices = @transform_0, window_bounds = array<i64: 1, 128, 32>}, {transform_indices = @transform_1, window_bounds = array<i64: 1, 32, 128>}, {transform_indices = @transform_2, window_bounds = array<i64: 1, 1, 128>}, {transform_indices = @transform_3, window_bounds = array<i64: 1, 128, 128>}, {transform_indices = @transform_4, window_bounds = array<i64: 1, 1, 128>}, {transform_indices = @transform_5, window_bounds = array<i64: 1, 128, 128>}]} {
    %c0 = arith.constant 0 : index
    %c0_0 = arith.constant 0 : index
    %c0_1 = arith.constant 0 : index
    %0 = vector.load %arg2[%c0, %c0_0, %c0_1] : memref<1x128x32xbf16, #tpu.memory_space<vmem>>, vector<1x128x32xbf16>
    %1 = vector.shape_cast %0 : vector<1x128x32xbf16> to vector<128x32xbf16>
    %c0_2 = arith.constant 0 : index
    %c0_3 = arith.constant 0 : index
    %c0_4 = arith.constant 0 : index
    %2 = vector.load %arg3[%c0_2, %c0_3, %c0_4] : memref<1x32x128xbf16, #tpu.memory_space<vmem>>, vector<1x32x128xbf16>
    %3 = vector.shape_cast %2 : vector<1x32x128xbf16> to vector<32x128xbf16>
    %cst = arith.constant dense<0.000000e+00> : vector<128x128xf32>
    %4 = tpu.matmul %1, %3, %cst {dimension_numbers = #tpu.dot_dimension_numbers<[1], [0], [0], [1], [0, 0, 1, 1], [], []>} : vector<128x32xbf16>, vector<32x128xbf16>, vector<128x128xf32> -> vector<128x128xf32>
    %c0_5 = arith.constant 0 : index
    %c0_6 = arith.constant 0 : index
    %c0_7 = arith.constant 0 : index
    %5 = vector.load %arg4[%c0_5, %c0_6, %c0_7] : memref<1x1x128xf32, #tpu.memory_space<vmem>>, vector<1x1x128xf32>
    %6 = vector.shape_cast %5 : vector<1x1x128xf32> to vector<1x128xf32>
    %7 = vector.broadcast %6 : vector<1x128xf32> to vector<128x128xf32>
    %8 = arith.addf %4, %7 : vector<128x128xf32>
    %cst_8 = arith.constant 0.000000e+00 : f32
    %9 = vector.broadcast %cst_8 : f32 to vector<128x128xf32>
    %10 = arith.maximumf %8, %9 : vector<128x128xf32>
    %11 = arith.truncf %10 : vector<128x128xf32> to vector<128x128xbf16>
    %c0_9 = arith.constant 0 : index
    %c0_10 = arith.constant 0 : index
    %c0_11 = arith.constant 0 : index
    %12 = vector.load %arg5[%c0_9, %c0_10, %c0_11] : memref<1x128x128xbf16, #tpu.memory_space<vmem>>, vector<1x128x128xbf16>
    %13 = vector.shape_cast %12 : vector<1x128x128xbf16> to vector<128x128xbf16>
    %cst_12 = arith.constant dense<0.000000e+00> : vector<128x128xf32>
    %14 = tpu.matmul %11, %13, %cst_12 {dimension_numbers = #tpu.dot_dimension_numbers<[1], [0], [0], [1], [0, 0, 1, 1], [], []>} : vector<128x128xbf16>, vector<128x128xbf16>, vector<128x128xf32> -> vector<128x128xf32>
    %c0_13 = arith.constant 0 : index
    %c0_14 = arith.constant 0 : index
    %c0_15 = arith.constant 0 : index
    %15 = vector.load %arg6[%c0_13, %c0_14, %c0_15] : memref<1x1x128xf32, #tpu.memory_space<vmem>>, vector<1x1x128xf32>
    %16 = vector.shape_cast %15 : vector<1x1x128xf32> to vector<1x128xf32>
    %17 = vector.broadcast %16 : vector<1x128xf32> to vector<128x128xf32>
    %18 = arith.addf %14, %17 : vector<128x128xf32>
    %19 = arith.truncf %18 : vector<128x128xf32> to vector<128x128xbf16>
    %c0_16 = arith.constant 0 : index
    %c0_17 = arith.constant 0 : index
    %c0_18 = arith.constant 0 : index
    %20 = vector.load %arg7[%c0_16, %c0_17, %c0_18] : memref<1x128x128xbf16, #tpu.memory_space<vmem>>, vector<1x128x128xbf16>
    %21 = vector.shape_cast %20 : vector<1x128x128xbf16> to vector<128x128xbf16>
    %22 = vector.shape_cast %19 : vector<128x128xbf16> to vector<1x128x128xbf16>
    tpu.vector_store %arg7[%c0_16, %c0_17, %c0_18], %22 {strides = array<i32>} : memref<1x128x128xbf16, #tpu.memory_space<vmem>>, vector<1x128x128xbf16>,
    return
  }
  func.func @transform_0(%arg0: i32, %arg1: i32) -> (i32, i32, i32) {
    %c0_i32 = arith.constant 0 : i32
    %c0_i32_0 = arith.constant 0 : i32
    return %arg0, %arg1, %c0_i32 : i32, i32, i32
  }
  func.func @transform_1(%arg0: i32, %arg1: i32) -> (i32, i32, i32) {
    %c0_i32 = arith.constant 0 : i32
    %c0_i32_0 = arith.constant 0 : i32
    %c0_i32_1 = arith.constant 0 : i32
    return %arg0, %c0_i32, %c0_i32_0 : i32, i32, i32
  }
  func.func @transform_2(%arg0: i32, %arg1: i32) -> (i32, i32, i32) {
    %c0_i32 = arith.constant 0 : i32
    %c0_i32_0 = arith.constant 0 : i32
    %c0_i32_1 = arith.constant 0 : i32
    return %arg0, %c0_i32, %c0_i32_0 : i32, i32, i32
  }
  func.func @transform_3(%arg0: i32, %arg1: i32) -> (i32, i32, i32) {
    %c0_i32 = arith.constant 0 : i32
    %c0_i32_0 = arith.constant 0 : i32
    %c0_i32_1 = arith.constant 0 : i32
    return %arg0, %c0_i32, %c0_i32_0 : i32, i32, i32
  }
  func.func @transform_4(%arg0: i32, %arg1: i32) -> (i32, i32, i32) {
    %c0_i32 = arith.constant 0 : i32
    %c0_i32_0 = arith.constant 0 : i32
    %c0_i32_1 = arith.constant 0 : i32
    return %arg0, %c0_i32, %c0_i32_0 : i32, i32, i32
  }
  func.func @transform_5(%arg0: i32, %arg1: i32) -> (i32, i32, i32) {
    %c0_i32 = arith.constant 0 : i32
    %c0_i32_0 = arith.constant 0 : i32
    return %arg0, %arg1, %c0_i32 : i32, i32, i32
  }
}

</mosaic_0001>

<llo_original>
// kernel: tpu_custom_call.1
$region0: #{tpu_custom_call.1}
  #allocation0 [shape = 'u32[]', space=smem, size = 0x4, offset = 0x4, fixed_abs, tag = 'smem constant byte address 0x4 - core index']
  #allocation1 [shape = 'u32[72,128]{1,0:T(1,128)}', space=vmem, size = 0x9000, scoped, tag = 'internal scratch']
  %s0 = inlined_call_operand.vmem [shape: bf16[3,128,32], index: 0, kind: input, shape index: {}]
  %s1 = inlined_call_operand.vmem [shape: bf16[3,32,128], index: 1, kind: input, shape index: {}]
  %s2 = inlined_call_operand.hbm [shape: f32[3,1,128], index: 2, kind: input, shape index: {}]
  %s3 = inlined_call_operand.vmem [shape: bf16[3,128,128], index: 3, kind: input, shape index: {}]
  %s4 = inlined_call_operand.hbm [shape: f32[3,1,128], index: 4, kind: input, shape index: {}]
  %s5 = inlined_call_operand.hbm [shape: bf16[3,128,128], index: 5, kind: output, shape index: {}]
  %s6 = sld [smem:[#allocation0]]
  $region61: #{tpu_custom_call.1} parent=0
    _
  %s8 = ssub.s32 1, %s6
  %s9 = scalar_select 0, %s8, %s6
  $region1: #{tpu_custom_call.1} parent=0
    #allocation2 [shape = 'u8[1024]{0}', space=vmem, size = 0x400, scoped, tag = 'input window, operand 2']
    #allocation3 [shape = 's32[2]{0}', space=sflag, size = 0x8, scoped, tag = 'scoped memory for tpu_custom_call.1']
    #allocation4 [shape = 's32[2]{0}', space=sflag, size = 0x8, scoped, tag = 'scoped memory for tpu_custom_call.1']
    #allocation5 [shape = 'u8[1024]{0}', space=vmem, size = 0x400, scoped, tag = 'input window, operand 4']
    #allocation6 [shape = 's32[2]{0}', space=sflag, size = 0x8, scoped, tag = 'scoped memory for tpu_custom_call.1']
    #allocation7 [shape = 'u8[65536]{0}', space=vmem, size = 0x10000, scoped, tag = 'output window, operand 0']
    %10 = vsyncpa [#allocation3], 0
    %s11 = scalar_lea.sflag [#allocation3], 1
    %12 = vsyncpa %s11, 0
    %13 = vsyncpa [#allocation6], 0
    %s14 = scalar_lea.sflag [#allocation6], 1
    %15 = vsyncpa %s14, 0
    %16 = vsyncpa [#allocation4], 0
    %s17 = scalar_lea.sflag [#allocation4], 1
    %18 = vsyncpa %s17, 0
    loop: start=0, step=1, limit=5
    $region2: #{tpu_custom_call.1} parent=1 // loop_pre_header
      _
    $region3: #{tpu_custom_call.1} parent=1 // loop_header
      %s20 = sphi 0, %s24
      %p21 = scmp.ge.s32.totalorder %s20, 5
      %s27 = sphi 0, %s39
      %s28 = sphi 0, %s35
      %s29 = sphi 0, %s27
      %s30 = sphi 0, %s28
      %s31 = sphi 0, %s29
      %s32 = sphi 0, %s30
      %s44 = sphi 0, %s46
      %s47 = sphi 0, %s44
      %s48 = sphi 0, %s47
      %s64 = sphi 0, %s48
      %s70 = sphi 0, %s72
      %s73 = sphi 0, %s70
      %s74 = sphi 0, %s73
      %s90 = sphi 0, %s74
      %s96 = sphi 0, %s98
      %s99 = sphi 0, %s96
      %s100 = sphi 0, %s99
      %s116 = sphi 0, %s100
      %s122 = sphi 0, %s124
      %s125 = sphi 0, %s122
      %s126 = sphi 0, %s125
      %s142 = sphi 0, %s126
      %s148 = sphi 0, %s150
      %s151 = sphi 0, %s148
      %s152 = sphi 0, %s151
      %s168 = sphi 0, %s152
      %s176 = sphi 0, %s178
      %s179 = sphi 0, %s176
      %s180 = sphi 0, %s179
      %s196 = sphi 0, %s180
    $region4: #{tpu_custom_call.1} parent=1 // loop_header_branch
      %23 = sbr.rel (%p21) target = $region8
    $region5: #{tpu_custom_call.1} parent=1 // loop_body
      %s25 = ssub.s32 %s20, 1
      %s26 = ssub.s32 %s20, 2
      %s33 = sadd.s32 1, %s28
      %p34 = scmp.ge.s32.totalorder %s33, 1
      %s35 = scalar_select %p34, 0, %s33
      %s36 = sadd.s32 1, %s27
      %s37 = scalar_select %p34, %s36, %s27
      %p38 = scmp.ge.s32.totalorder %s37, 3
      %s39 = scalar_select %p38, 0, %s37
      %s40 = ssub.s32 %s27, %s39
      %s41 = ssub.s32 %s28, %s35
      %s42 = sor.u32 %s40, %s41
      %p43 = scmp.eq.s32.totalorder %s42, 0
      %s45 = sadd.s32 %s44, 1
      %s46 = scalar_select %p43, %s44, %s45
      %p49 = pneg %p43
      %p50 = scmp.eq.s32.totalorder %s20, 2
      %p51 = por %p49, %p50
      %p52 = scmp.ne.s32.totalorder %s44, %s47
      %p53 = scmp.eq.s32.totalorder %s20, 0
      %p54 = por %p52, %p53
      %p55 = scmp.ne.s32.totalorder %s44, %s47
      %p56 = scmp.eq.s32.totalorder %s25, 2
      %p57 = por %p55, %p56
      %p58 = scmp.ne.s32.totalorder %s47, %s48
      %p59 = scmp.eq.s32.totalorder %s25, 0
      %p60 = por %p58, %p59
      %p61 = scmp.ne.s32.totalorder %s47, %s48
      %p62 = scmp.eq.s32.totalorder %s26, 2
      %p63 = por %p61, %p62
      %p65 = scmp.ne.s32.totalorder %s48, %s64
      %p66 = scmp.eq.s32.totalorder %s26, 0
      %p67 = por %p65, %p66
      %s68 = ssub.s32 %s27, %s39
      %p69 = scmp.eq.s32.totalorder %s68, 0
      %s71 = sadd.s32 %s70, 1
      %s72 = scalar_select %p69, %s70, %s71
      %p75 = pneg %p69
      %p76 = scmp.eq.s32.totalorder %s20, 2
      %p77 = por %p75, %p76
      %p78 = scmp.ne.s32.totalorder %s70, %s73
      %p79 = scmp.eq.s32.totalorder %s20, 0
      %p80 = por %p78, %p79
      %p81 = scmp.ne.s32.totalorder %s70, %s73
      %p82 = scmp.eq.s32.totalorder %s25, 2
      %p83 = por %p81, %p82
      %p84 = scmp.ne.s32.totalorder %s73, %s74
      %p85 = scmp.eq.s32.totalorder %s25, 0
      %p86 = por %p84, %p85
      %p87 = scmp.ne.s32.totalorder %s73, %s74
      %p88 = scmp.eq.s32.totalorder %s26, 2
      %p89 = por %p87, %p88
      %p91 = scmp.ne.s32.totalorder %s74, %s90
      %p92 = scmp.eq.s32.totalorder %s26, 0
      %p93 = por %p91, %p92
      %s94 = ssub.s32 %s27, %s39
      %p95 = scmp.eq.s32.totalorder %s94, 0
      %s97 = sadd.s32 %s96, 1
      %s98 = scalar_select %p95, %s96, %s97
      %p101 = pneg %p95
      %p102 = scmp.eq.s32.totalorder %s20, 2
      %p103 = por %p101, %p102
      %p104 = scmp.ne.s32.totalorder %s96, %s99
      %p105 = scmp.eq.s32.totalorder %s20, 0
      %p106 = por %p104, %p105
      %p107 = scmp.ne.s32.totalorder %s96, %s99
      %p108 = scmp.eq.s32.totalorder %s25, 2
      %p109 = por %p107, %p108
      %p110 = scmp.ne.s32.totalorder %s99, %s100
      %p111 = scmp.eq.s32.totalorder %s25, 0
      %p112 = por %p110, %p111
      %p113 = scmp.ne.s32.totalorder %s99, %s100
      %p114 = scmp.eq.s32.totalorder %s26, 2
      %p115 = por %p113, %p114
      %p117 = scmp.ne.s32.totalorder %s100, %s116
      %p118 = scmp.eq.s32.totalorder %s26, 0
      %p119 = por %p117, %p118
      %s120 = ssub.s32 %s27, %s39
      %p121 = scmp.eq.s32.totalorder %s120, 0
      %s123 = sadd.s32 %s122, 1
      %s124 = scalar_select %p121, %s122, %s123
      %p127 = pneg %p121
      %p128 = scmp.eq.s32.totalorder %s20, 2
      %p129 = por %p127, %p128
      %p130 = scmp.ne.s32.totalorder %s122, %s125
      %p131 = scmp.eq.s32.totalorder %s20, 0
      %p132 = por %p130, %p131
      %p133 = scmp.ne.s32.totalorder %s122, %s125
      %p134 = scmp.eq.s32.totalorder %s25, 2
      %p135 = por %p133, %p134
      %p136 = scmp.ne.s32.totalorder %s125, %s126
      %p137 = scmp.eq.s32.totalorder %s25, 0
      %p138 = por %p136, %p137
      %p139 = scmp.ne.s32.totalorder %s125, %s126
      %p140 = scmp.eq.s32.totalorder %s26, 2
      %p141 = por %p139, %p140
      %p143 = scmp.ne.s32.totalorder %s126, %s142
      %p144 = scmp.eq.s32.totalorder %s26, 0
      %p145 = por %p143, %p144
      %s146 = ssub.s32 %s27, %s39
      %p147 = scmp.eq.s32.totalorder %s146, 0
      %s149 = sadd.s32 %s148, 1
      %s150 = scalar_select %p147, %s148, %s149
      %p153 = pneg %p147
      %p154 = scmp.eq.s32.totalorder %s20, 2
      %p155 = por %p153, %p154
      %p156 = scmp.ne.s32.totalorder %s148, %s151
      %p157 = scmp.eq.s32.totalorder %s20, 0
      %p158 = por %p156, %p157
      %p159 = scmp.ne.s32.totalorder %s148, %s151
      %p160 = scmp.eq.s32.totalorder %s25, 2
      %p161 = por %p159, %p160
      %p162 = scmp.ne.s32.totalorder %s151, %s152
      %p163 = scmp.eq.s32.totalorder %s25, 0
      %p164 = por %p162, %p163
      %p165 = scmp.ne.s32.totalorder %s151, %s152
      %p166 = scmp.eq.s32.totalorder %s26, 2
      %p167 = por %p165, %p166
      %p169 = scmp.ne.s32.totalorder %s152, %s168
      %p170 = scmp.eq.s32.totalorder %s26, 0
      %p171 = por %p169, %p170
      %s172 = ssub.s32 %s27, %s39
      %s173 = ssub.s32 %s28, %s35
      %s174 = sor.u32 %s172, %s173
      %p175 = scmp.eq.s32.totalorder %s174, 0
      %s177 = sadd.s32 %s176, 1
      %s178 = scalar_select %p175, %s176, %s177
      %p181 = pneg %p175
      %p182 = scmp.eq.s32.totalorder %s20, 2
      %p183 = por %p181, %p182
      %p184 = scmp.ne.s32.totalorder %s176, %s179
      %p185 = scmp.eq.s32.totalorder %s20, 0
      %p186 = por %p184, %p185
      %p187 = scmp.ne.s32.totalorder %s176, %s179
      %p188 = scmp.eq.s32.totalorder %s25, 2
      %p189 = por %p187, %p188
      %p190 = scmp.ne.s32.totalorder %s179, %s180
      %p191 = scmp.eq.s32.totalorder %s25, 0
      %p192 = por %p190, %p191
      %p193 = scmp.ne.s32.totalorder %s179, %s180
      %p194 = scmp.eq.s32.totalorder %s26, 2
      %p195 = por %p193, %p194
      %p197 = scmp.ne.s32.totalorder %s180, %s196
      %p198 = scmp.eq.s32.totalorder %s26, 0
      %p199 = por %p197, %p198
      %p200 = scmp.le.s32.totalorder 1, %s20
      %p201 = scmp.lt.s32.totalorder %s20, 4
      %p202 = pnand %p200, %p201
      %p203 = pneg %p202
      // Predicated region
      $region9: #{tpu_custom_call.1} parent=5 // pred_check
        _
      $region10: #{tpu_custom_call.1} parent=5 // pred_check_branch
        %205 = sbr.rel (%p202) target = $region12
      $region11: #{tpu_custom_call.1} parent=5 // pred_region
        %s206 = ssub.s32 %s20, 1
      $region12: #{tpu_custom_call.1} parent=5 // pred_fallthru
        _
      %p207 = scmp.lt.s32.totalorder %s20, 3
      // Predicated region
      $region13: #{tpu_custom_call.1} parent=5 // pred_check
        %p208 = pneg %p207
      $region14: #{tpu_custom_call.1} parent=5 // pred_check_branch
        %210 = sbr.rel (%p208) target = $region16
      $region15: #{tpu_custom_call.1} parent=5 // pred_region
        // Predicated region
        $region17: #{tpu_custom_call.1} parent=15 // pred_check
          %p211 = pneg %p54
        $region18: #{tpu_custom_call.1} parent=15 // pred_check_branch
          %213 = sbr.rel (%p211) target = $region20
        $region19: #{tpu_custom_call.1} parent=15 // pred_region
          %s214 = smul.u32 16, %s28
          %p215 = scmp.lt.s32.totalorder %s27, 2
          %s216 = scalar_select %p215, %s27, 2
          %p217 = scmp.lt.s32.totalorder %s214, 15
          %s218 = scalar_select %p217, %s214, 15
          %s219 = smul.addr %s216, 16
          %s220 = sadd.s32 %s218, %s219
          %s221 = smul.addr %s220, 4
          %s222 = scalar_lea.vmem %s0, %s221
          %s223 = smul.u32 16, %s28
        $region20: #{tpu_custom_call.1} parent=15 // pred_fallthru
          _
        // Predicated region
        $region21: #{tpu_custom_call.1} parent=15 // pred_check
          %p224 = pneg %p80
        $region22: #{tpu_custom_call.1} parent=15 // pred_check_branch
          %226 = sbr.rel (%p224) target = $region24
        $region23: #{tpu_custom_call.1} parent=15 // pred_region
          %p227 = scmp.lt.s32.totalorder %s27, 2
          %s228 = scalar_select %p227, %s27, 2
          %s229 = smul.addr %s228, 4
          %s230 = smul.addr %s229, 4
          %s231 = scalar_lea.vmem %s1, %s230
        $region24: #{tpu_custom_call.1} parent=15 // pred_fallthru
          _
        // Predicated region
        $region25: #{tpu_custom_call.1} parent=15 // pred_check
          %p232 = pneg %p106
        $region26: #{tpu_custom_call.1} parent=15 // pred_check_branch
          %234 = sbr.rel (%p232) target = $region28
        $region27: #{tpu_custom_call.1} parent=15 // pred_region
          %s235 = sand.u32 %s96, 1
          %s236 = scalar_lea.sflag [#allocation3], %s235
          %s237 = sand.u32 %s96, 1
          %s238 = scalar_lea.vmem [#allocation2], %s237
          %240 = vsyncadd %s236, 0
          %s241 = scalar_lea.hbm %s2, %s27
          %s243 = sshll.u32 %s241, 4
          %s244 = int_to_ptr.hbm [resolvable:$true] %s243
          %s245 = sshll.u32 %s238, 4
          %s246 = int_to_ptr.vmem [resolvable:$true] %s245
          %248 = dma.hbm_to_vmem [thread:$0]  %s244, 16, %s246, %s236
        $region28: #{tpu_custom_call.1} parent=15 // pred_fallthru
          _
        // Predicated region
        $region29: #{tpu_custom_call.1} parent=15 // pred_check
          %p249 = pneg %p132
        $region30: #{tpu_custom_call.1} parent=15 // pred_check_branch
          %251 = sbr.rel (%p249) target = $region32
        $region31: #{tpu_custom_call.1} parent=15 // pred_region
          %p252 = scmp.lt.s32.totalorder %s27, 2
          %s253 = scalar_select %p252, %s27, 2
          %s254 = smul.addr %s253, 16
          %s255 = smul.addr %s254, 4
          %s256 = scalar_lea.vmem %s3, %s255
        $region32: #{tpu_custom_call.1} parent=15 // pred_fallthru
          _
        // Predicated region
        $region33: #{tpu_custom_call.1} parent=15 // pred_check
          %p257 = pneg %p158
        $region34: #{tpu_custom_call.1} parent=15 // pred_check_branch
          %259 = sbr.rel (%p257) target = $region36
        $region35: #{tpu_custom_call.1} parent=15 // pred_region
          %s260 = sand.u32 %s148, 1
          %s261 = scalar_lea.sflag [#allocation6], %s260
          %s262 = sand.u32 %s148, 1
          %s263 = scalar_lea.vmem [#allocation5], %s262
          %265 = vsyncadd %s261, 0
          %s266 = scalar_lea.hbm %s4, %s27
          %s268 = sshll.u32 %s266, 4
          %s269 = int_to_ptr.hbm [resolvable:$true] %s268
          %s270 = sshll.u32 %s263, 4
          %s271 = int_to_ptr.vmem [resolvable:$true] %s270
          %273 = dma.hbm_to_vmem [thread:$0]  %s269, 16, %s271, %s261
        $region36: #{tpu_custom_call.1} parent=15 // pred_fallthru
          _
      $region16: #{tpu_custom_call.1} parent=5 // pred_fallthru
        _
      %p274 = scmp.le.s32.totalorder 1, %s20
      %p275 = scmp.lt.s32.totalorder %s20, 4
      %p276 = pnand %p274, %p275
      %p277 = pneg %p276
      // Predicated region
      $region37: #{tpu_custom_call.1} parent=5 // pred_check
        _
      $region38: #{tpu_custom_call.1} parent=5 // pred_check_branch
        %279 = sbr.rel (%p276) target = $region40
      $region39: #{tpu_custom_call.1} parent=5 // pred_region
        %s280 = ssub.s32 %s20, 1
        %s281 = sand.u32 %s99, 1
        %s282 = scalar_lea.sflag [#allocation3], %s281
        %s283 = sand.u32 %s99, 1
        %s284 = scalar_lea.vmem [#allocation2], %s283
        // Predicated region
        $region41: #{tpu_custom_call.1} parent=39 // pred_check
          %p285 = pneg %p112
        $region42: #{tpu_custom_call.1} parent=39 // pred_check_branch
          %287 = sbr.rel (%p285) target = $region44
        $region43: #{tpu_custom_call.1} parent=39 // pred_region
          %289 = dma.done %s282, 16
        $region44: #{tpu_custom_call.1} parent=39 // pred_fallthru
          _
        %s290 = sand.u32 %s151, 1
        %s291 = scalar_lea.sflag [#allocation6], %s290
        %s292 = sand.u32 %s151, 1
        %s293 = scalar_lea.vmem [#allocation5], %s292
        // Predicated region
        $region45: #{tpu_custom_call.1} parent=39 // pred_check
          %p294 = pneg %p164
        $region46: #{tpu_custom_call.1} parent=39 // pred_check_branch
          %296 = sbr.rel (%p294) target = $region48
        $region47: #{tpu_custom_call.1} parent=39 // pred_region
          %298 = dma.done %s291, 16
        $region48: #{tpu_custom_call.1} parent=39 // pred_fallthru
          _
        %s299 = smul.u32 16, %s30
        %p300 = scmp.lt.s32.totalorder %s29, 2
        %s301 = scalar_select %p300, %s29, 2
        %p302 = scmp.lt.s32.totalorder %s299, 15
        %s303 = scalar_select %p302, %s299, 15
        %s304 = smul.addr %s301, 16
        %s305 = sadd.s32 %s303, %s304
        %s306 = smul.addr %s305, 4
        %s307 = scalar_lea.vmem %s0, %s306
        %p308 = pneg %p60
        %p309 = pneg %p57
        %p310 = scmp.lt.s32.totalorder %s29, 2
        %s311 = scalar_select %p310, %s29, 2
        %s312 = smul.addr %s311, 4
        %s313 = smul.addr %s312, 4
        %s314 = scalar_lea.vmem %s1, %s313
        %p315 = pneg %p86
        %p316 = pneg %p83
        %s317 = sand.u32 %s99, 1
        %s318 = scalar_lea.sflag [#allocation3], %s317
        %s319 = sand.u32 %s99, 1
        %s320 = scalar_lea.vmem [#allocation2], %s319
        %p321 = pneg %p112
        %p322 = pneg %p109
        %p323 = scmp.lt.s32.totalorder %s29, 2
        %s324 = scalar_select %p323, %s29, 2
        %s325 = smul.addr %s324, 16
        %s326 = smul.addr %s325, 4
        %s327 = scalar_lea.vmem %s3, %s326
        %p328 = pneg %p138
        %p329 = pneg %p135
        %s330 = sand.u32 %s151, 1
        %s331 = scalar_lea.sflag [#allocation6], %s330
        %s332 = sand.u32 %s151, 1
        %s333 = scalar_lea.vmem [#allocation5], %s332
        %p334 = pneg %p164
        %p335 = pneg %p161
        %p336 = pneg %p192
        %p337 = pneg %p189
        %s338 = sand.u32 %s179, 1
        %s339 = scalar_lea.sflag [#allocation4], %s338
        %s340 = sand.u32 %s179, 1
        %s341 = smul.addr %s340, 64
        %s342 = scalar_lea.vmem [#allocation7], %s341
        %s343 = smul.u32 16, %s30
        %p344 = scmp.lt.s32.totalorder %s29, 2
        %s345 = scalar_select %p344, %s29, 2
        %p346 = scmp.lt.s32.totalorder %s343, 15
        %s347 = scalar_select %p346, %s343, 15
        %s348 = smul.addr %s345, 16
        %s349 = sadd.s32 %s347, %s348
        %s350 = smul.addr %s349, 4
        %s351 = scalar_lea.vmem %s0, %s350
        %s352 = smul.u32 16, %s30
        %p353 = scmp.lt.s32.totalorder %s29, 2
        %s354 = scalar_select %p353, %s29, 2
        %s355 = smul.addr %s354, 4
        %s356 = smul.addr %s355, 4
        %s357 = scalar_lea.vmem %s1, %s356
        %p358 = scmp.lt.s32.totalorder %s29, 2
        %s359 = scalar_select %p358, %s29, 2
        %s360 = smul.addr %s359, 16
        %s361 = smul.addr %s360, 4
        %s362 = scalar_lea.vmem %s3, %s361
        %s363 = smul.u32 16, %s30
        %v365 = vld [vmem:[%s351] sm:$0xf]
        %v366 = vld [vmem:[%s351 + $0x4] sm:$0xf]
        %v367 = vld [vmem:[%s351 + $0x8] sm:$0xf]
        %v368 = vld [vmem:[%s351 + $0xc] sm:$0xf]
        %v369 = vld [vmem:[%s351 + $0x10] sm:$0xf]
        %v370 = vld [vmem:[%s351 + $0x14] sm:$0xf]
        %v371 = vld [vmem:[%s351 + $0x18] sm:$0xf]
        %v372 = vld [vmem:[%s351 + $0x1c] sm:$0xf]
        %v373 = vld [vmem:[%s351 + $0x20] sm:$0xf]
        %v374 = vld [vmem:[%s351 + $0x24] sm:$0xf]
        %v375 = vld [vmem:[%s351 + $0x28] sm:$0xf]
        %v376 = vld [vmem:[%s351 + $0x2c] sm:$0xf]
        %v377 = vld [vmem:[%s351 + $0x30] sm:$0xf]
        %v378 = vld [vmem:[%s351 + $0x34] sm:$0xf]
        %v379 = vld [vmem:[%s351 + $0x38] sm:$0xf]
        %v380 = vld [vmem:[%s351 + $0x3c] sm:$0xf]
        %v381 = vld [vmem:[%s357] sm:$0xf]
        %v382 = vld [vmem:[%s357 + $0x4] sm:$0xf]
        %v383 = vld [vmem:[%s357 + $0x8] sm:$0xf]
        %v384 = vld [vmem:[%s357 + $0xc] sm:$0xf]
        %v385 = vld [vmem:[%s284] sm:$0x1]
        %v387 = vperm.slane %v385, 0
        %v405 = vunpack.c.l.b16 %v365
        %v406 = vunpack.c.l.b16 %v366
        %v407 = vunpack.c.l.b16 %v367
        %v408 = vunpack.c.l.b16 %v368
        %v409 = vunpack.c.l.b16 %v369
        %v410 = vunpack.c.l.b16 %v370
        %v411 = vunpack.c.l.b16 %v371
        %v412 = vunpack.c.l.b16 %v372
        %v413 = vunpack.c.l.b16 %v373
        %v414 = vunpack.c.l.b16 %v374
        %v415 = vunpack.c.l.b16 %v375
        %v416 = vunpack.c.l.b16 %v376
        %v417 = vunpack.c.l.b16 %v377
        %v418 = vunpack.c.l.b16 %v378
        %v419 = vunpack.c.l.b16 %v379
        %v420 = vunpack.c.l.b16 %v380
        %v421 = vpack.c.b16 %v406, %v405
        %v422 = vpack.c.b16 %v408, %v407
        %v423 = vpack.c.b16 %v410, %v409
        %v424 = vpack.c.b16 %v412, %v411
        %v425 = vpack.c.b16 %v414, %v413
        %v426 = vpack.c.b16 %v416, %v415
        %v427 = vpack.c.b16 %v418, %v417
        %v428 = vpack.c.b16 %v420, %v419
        %v433 = vunpack.c.l.b16 %v381
        %v434 = vunpack.c.l.b16 %v382
        %v435 = vunpack.c.l.b16 %v383
        %v436 = vunpack.c.l.b16 %v384
        %v437 = vpack.c.b16 %v434, %v433
        %v438 = vpack.c.b16 %v436, %v435
        %vm441 = vcmask 261120
        %v443 = vsel %vm441, %v421, 0
        %v446 = vsel %vm441, %v422, 0
        %v449 = vsel %vm441, %v423, 0
        %v452 = vsel %vm441, %v424, 0
        %v455 = vsel %vm441, %v425, 0
        %v458 = vsel %vm441, %v426, 0
        %v461 = vsel %vm441, %v427, 0
        %v464 = vsel %vm441, %v428, 0
        %466 = vmatpush.bf16.msra.mxu0 0
        %467 = vmatpush.bf16.msra.mxu0 0
        %468 = vmatpush.bf16.msra.mxu0 0
        %469 = vmatpush.bf16.msra.mxu0 0
        %470 = vmatpush.bf16.msra.mxu0 0
        %471 = vmatpush.bf16.msra.mxu0 0
        %472 = vmatpush.bf16.msra.mxu0 %v438
        %473 = vmatpush.bf16.msra.mxu0 %v437
        %474 = vmatmul.bf16.gmra.mxu0 %v443
        %v475 = vpop.f32.mrf.mxu0
        %v476 = vadd.f32 %v387, %v475
        %v477 = vpop.f32.mrf.mxu0
        %v478 = vadd.f32 %v387, %v477
        %479 = vmatmul.bf16.gmra.mxu0 %v446
        %v480 = vpop.f32.mrf.mxu0
        %v481 = vadd.f32 %v387, %v480
        %v482 = vpop.f32.mrf.mxu0
        %v483 = vadd.f32 %v387, %v482
        %484 = vmatmul.bf16.gmra.mxu0 %v449
        %v485 = vpop.f32.mrf.mxu0
        %v486 = vadd.f32 %v387, %v485
        %v487 = vpop.f32.mrf.mxu0
        %v488 = vadd.f32 %v387, %v487
        %489 = vmatmul.bf16.gmra.mxu0 %v452
        %v490 = vpop.f32.mrf.mxu0
        %v491 = vadd.f32 %v387, %v490
        %v492 = vpop.f32.mrf.mxu0
        %v493 = vadd.f32 %v387, %v492
        %494 = vmatmul.bf16.gmra.mxu0 %v455
        %v495 = vpop.f32.mrf.mxu0
        %v496 = vadd.f32 %v387, %v495
        %v497 = vpop.f32.mrf.mxu0
        %v498 = vadd.f32 %v387, %v497
        %499 = vmatmul.bf16.gmra.mxu0 %v458
        %v500 = vpop.f32.mrf.mxu0
        %v501 = vadd.f32 %v387, %v500
        %v502 = vpop.f32.mrf.mxu0
        %v503 = vadd.f32 %v387, %v502
        %504 = vmatmul.bf16.gmra.mxu0 %v461
        %v505 = vpop.f32.mrf.mxu0
        %v506 = vadd.f32 %v387, %v505
        %v507 = vpop.f32.mrf.mxu0
        %v508 = vadd.f32 %v387, %v507
        %509 = vmatmul.bf16.gmra.mxu0 %v464
        %v510 = vpop.f32.mrf.mxu0
        %v511 = vadd.f32 %v387, %v510
        %v512 = vpop.f32.mrf.mxu0
        %v513 = vadd.f32 %v387, %v512
        %514 = vdwg.mxu0
        %v515 = vmax.f32 %v476, 0.0
        %v516 = vmax.f32 %v478, 0.0
        %v517 = vmax.f32 %v481, 0.0
        %v518 = vmax.f32 %v483, 0.0
        %v519 = vmax.f32 %v486, 0.0
        %v520 = vmax.f32 %v488, 0.0
        %v521 = vmax.f32 %v491, 0.0
        %v522 = vmax.f32 %v493, 0.0
        %v523 = vmax.f32 %v496, 0.0
        %v524 = vmax.f32 %v498, 0.0
        %v525 = vmax.f32 %v501, 0.0
        %v526 = vmax.f32 %v503, 0.0
        %v527 = vmax.f32 %v506, 0.0
        %v528 = vmax.f32 %v508, 0.0
        %v529 = vmax.f32 %v511, 0.0
        %v530 = vmax.f32 %v513, 0.0
        %v531 = vpack.c.bf16 %v516, %v515
        %v532 = vpack.c.bf16 %v518, %v517
        %v533 = vpack.c.bf16 %v520, %v519
        %v534 = vpack.c.bf16 %v522, %v521
        %v535 = vpack.c.bf16 %v524, %v523
        %v536 = vpack.c.bf16 %v526, %v525
        %v537 = vpack.c.bf16 %v528, %v527
        %v538 = vpack.c.bf16 %v530, %v529
        %v539 = vld [vmem:[%s362] sm:$0xf]
        %v540 = vld [vmem:[%s362 + $0x4] sm:$0xf]
        %v541 = vld [vmem:[%s362 + $0x8] sm:$0xf]
        %v542 = vld [vmem:[%s362 + $0xc] sm:$0xf]
        %v543 = vld [vmem:[%s362 + $0x10] sm:$0xf]
        %v544 = vld [vmem:[%s362 + $0x14] sm:$0xf]
        %v545 = vld [vmem:[%s362 + $0x18] sm:$0xf]
        %v546 = vld [vmem:[%s362 + $0x1c] sm:$0xf]
        %v547 = vld [vmem:[%s362 + $0x20] sm:$0xf]
        %v548 = vld [vmem:[%s362 + $0x24] sm:$0xf]
        %v549 = vld [vmem:[%s362 + $0x28] sm:$0xf]
        %v550 = vld [vmem:[%s362 + $0x2c] sm:$0xf]
        %v551 = vld [vmem:[%s362 + $0x30] sm:$0xf]
        %v552 = vld [vmem:[%s362 + $0x34] sm:$0xf]
        %v553 = vld [vmem:[%s362 + $0x38] sm:$0xf]
        %v554 = vld [vmem:[%s362 + $0x3c] sm:$0xf]
        %v555 = vld [vmem:[%s293] sm:$0x1]
        %v557 = vperm.slane %v555, 0
        %v575 = vunpack.c.l.b16 %v539
        %v576 = vunpack.c.l.b16 %v540
        %v577 = vunpack.c.l.b16 %v541
        %v578 = vunpack.c.l.b16 %v542
        %v579 = vunpack.c.l.b16 %v543
        %v580 = vunpack.c.l.b16 %v544
        %v581 = vunpack.c.l.b16 %v545
        %v582 = vunpack.c.l.b16 %v546
        %v583 = vunpack.c.l.b16 %v547
        %v584 = vunpack.c.l.b16 %v548
        %v585 = vunpack.c.l.b16 %v549
        %v586 = vunpack.c.l.b16 %v550
        %v587 = vunpack.c.l.b16 %v551
        %v588 = vunpack.c.l.b16 %v552
        %v589 = vunpack.c.l.b16 %v553
        %v590 = vunpack.c.l.b16 %v554
        %v591 = vpack.c.b16 %v576, %v575
        %v592 = vpack.c.b16 %v578, %v577
        %v593 = vpack.c.b16 %v580, %v579
        %v594 = vpack.c.b16 %v582, %v581
        %v595 = vpack.c.b16 %v584, %v583
        %v596 = vpack.c.b16 %v586, %v585
        %v597 = vpack.c.b16 %v588, %v587
        %v598 = vpack.c.b16 %v590, %v589
        %607 = vmatpush.bf16.msra.mxu0 %v598
        %608 = vmatpush.bf16.msra.mxu0 %v597
        %609 = vmatpush.bf16.msra.mxu0 %v596
        %610 = vmatpush.bf16.msra.mxu0 %v595
        %611 = vmatpush.bf16.msra.mxu0 %v594
        %612 = vmatpush.bf16.msra.mxu0 %v593
        %613 = vmatpush.bf16.msra.mxu0 %v592
        %614 = vmatpush.bf16.msra.mxu0 %v591
        %615 = vmatmul.bf16.gmra.mxu0 %v531
        %v616 = vpop.f32.mrf.mxu0
        %v617 = vadd.f32 %v557, %v616
        %v618 = vpop.f32.mrf.mxu0
        %v619 = vadd.f32 %v557, %v618
        %620 = vmatmul.bf16.gmra.mxu0 %v532
        %v621 = vpop.f32.mrf.mxu0
        %v622 = vadd.f32 %v557, %v621
        %v623 = vpop.f32.mrf.mxu0
        %v624 = vadd.f32 %v557, %v623
        %625 = vmatmul.bf16.gmra.mxu0 %v533
        %v626 = vpop.f32.mrf.mxu0
        %v627 = vadd.f32 %v557, %v626
        %v628 = vpop.f32.mrf.mxu0
        %v629 = vadd.f32 %v557, %v628
        %630 = vmatmul.bf16.gmra.mxu0 %v534
        %v631 = vpop.f32.mrf.mxu0
        %v632 = vadd.f32 %v557, %v631
        %v633 = vpop.f32.mrf.mxu0
        %v634 = vadd.f32 %v557, %v633
        %635 = vmatmul.bf16.gmra.mxu0 %v535
        %v636 = vpop.f32.mrf.mxu0
        %v637 = vadd.f32 %v557, %v636
        %v638 = vpop.f32.mrf.mxu0
        %v639 = vadd.f32 %v557, %v638
        %640 = vmatmul.bf16.gmra.mxu0 %v536
        %v641 = vpop.f32.mrf.mxu0
        %v642 = vadd.f32 %v557, %v641
        %v643 = vpop.f32.mrf.mxu0
        %v644 = vadd.f32 %v557, %v643
        %645 = vmatmul.bf16.gmra.mxu0 %v537
        %v646 = vpop.f32.mrf.mxu0
        %v647 = vadd.f32 %v557, %v646
        %v648 = vpop.f32.mrf.mxu0
        %v649 = vadd.f32 %v557, %v648
        %650 = vmatmul.bf16.gmra.mxu0 %v538
        %v651 = vpop.f32.mrf.mxu0
        %v652 = vadd.f32 %v557, %v651
        %v653 = vpop.f32.mrf.mxu0
        %v654 = vadd.f32 %v557, %v653
        %655 = vdwg.mxu0
        %v656 = vpack.c.bf16 %v617, %v617
        %v657 = vpack.c.bf16 %v619, %v619
        %v658 = vpack.c.bf16 %v622, %v622
        %v659 = vpack.c.bf16 %v624, %v624
        %v660 = vpack.c.bf16 %v627, %v627
        %v661 = vpack.c.bf16 %v629, %v629
        %v662 = vpack.c.bf16 %v632, %v632
        %v663 = vpack.c.bf16 %v634, %v634
        %v664 = vpack.c.bf16 %v637, %v637
        %v665 = vpack.c.bf16 %v639, %v639
        %v666 = vpack.c.bf16 %v642, %v642
        %v667 = vpack.c.bf16 %v644, %v644
        %v668 = vpack.c.bf16 %v647, %v647
        %v669 = vpack.c.bf16 %v649, %v649
        %v670 = vpack.c.bf16 %v652, %v652
        %v671 = vpack.c.bf16 %v654, %v654
        %672 = vst [vmem:[%s342] sm:$0xf] %v656
        %673 = vst [vmem:[%s342 + $0x4] sm:$0xf] %v657
        %674 = vst [vmem:[%s342 + $0x8] sm:$0xf] %v658
        %675 = vst [vmem:[%s342 + $0xc] sm:$0xf] %v659
        %676 = vst [vmem:[%s342 + $0x10] sm:$0xf] %v660
        %677 = vst [vmem:[%s342 + $0x14] sm:$0xf] %v661
        %678 = vst [vmem:[%s342 + $0x18] sm:$0xf] %v662
        %679 = vst [vmem:[%s342 + $0x1c] sm:$0xf] %v663
        %680 = vst [vmem:[%s342 + $0x20] sm:$0xf] %v664
        %681 = vst [vmem:[%s342 + $0x24] sm:$0xf] %v665
        %682 = vst [vmem:[%s342 + $0x28] sm:$0xf] %v666
        %683 = vst [vmem:[%s342 + $0x2c] sm:$0xf] %v667
        %684 = vst [vmem:[%s342 + $0x30] sm:$0xf] %v668
        %685 = vst [vmem:[%s342 + $0x34] sm:$0xf] %v669
        %686 = vst [vmem:[%s342 + $0x38] sm:$0xf] %v670
        %687 = vst [vmem:[%s342 + $0x3c] sm:$0xf] %v671
        %s688 = sand.u32 %s179, 1
        %s689 = scalar_lea.sflag [#allocation4], %s688
        %s690 = sand.u32 %s179, 1
        %s691 = smul.addr %s690, 64
        %s692 = scalar_lea.vmem [#allocation7], %s691
        // Predicated region
        $region49: #{tpu_custom_call.1} parent=39 // pred_check
          %p693 = pneg %p189
        $region50: #{tpu_custom_call.1} parent=39 // pred_check_branch
          %695 = sbr.rel (%p693) target = $region52
        $region51: #{tpu_custom_call.1} parent=39 // pred_region
          %s696 = smul.u32 16, %s30
          %698 = vsyncadd %s689, 0
          %s699 = smul.addr %s29, 16
          %s700 = sadd.s32 %s696, %s699
          %s701 = smul.addr %s700, 4
          %s702 = scalar_lea.hbm %s5, %s701
          %s703 = sshll.u32 %s692, 4
          %s704 = int_to_ptr.vmem [resolvable:$true] %s703
          %s705 = sshll.u32 %s702, 4
          %s706 = int_to_ptr.hbm [resolvable:$true] %s705
          %711 = dma.vmem_to_hbm [thread:$0]  %s704, 1024, %s706, %s689, 64, 64, 4
        $region52: #{tpu_custom_call.1} parent=39 // pred_fallthru
          _
      $region40: #{tpu_custom_call.1} parent=5 // pred_fallthru
        _
      %p712 = scmp.le.s32.totalorder 2, %s20
      // Predicated region
      $region53: #{tpu_custom_call.1} parent=5 // pred_check
        %p713 = pneg %p712
      $region54: #{tpu_custom_call.1} parent=5 // pred_check_branch
        %715 = sbr.rel (%p713) target = $region56
      $region55: #{tpu_custom_call.1} parent=5 // pred_region
        %s716 = ssub.s32 %s20, 2
        // Predicated region
        $region57: #{tpu_custom_call.1} parent=55 // pred_check
          %p717 = pneg %p195
        $region58: #{tpu_custom_call.1} parent=55 // pred_check_branch
          %719 = sbr.rel (%p717) target = $region60
        $region59: #{tpu_custom_call.1} parent=55 // pred_region
          %s720 = sand.u32 %s180, 1
          %s721 = scalar_lea.sflag [#allocation4], %s720
          %s722 = sand.u32 %s180, 1
          %s723 = smul.addr %s722, 64
          %s724 = scalar_lea.vmem [#allocation7], %s723
          %726 = dma.done %s721, 1024
        $region60: #{tpu_custom_call.1} parent=55 // pred_fallthru
          _
      $region56: #{tpu_custom_call.1} parent=5 // pred_fallthru
        _
    $region6: #{tpu_custom_call.1} parent=1 // loop_footer
      %s24 = sadd.s32 1, %s20
    $region7: #{tpu_custom_call.1} parent=1 // loop_footer_branch
      %19 = sbr.rel target = $region3
    $region8: #{tpu_custom_call.1} parent=1 // loop_exit
      _
    %727 = vsyncpa [#allocation3], 1
    %s728 = scalar_lea.sflag [#allocation3], 1
    %729 = vsyncpa %s728, 1
    %730 = vsyncpa [#allocation6], 1
    %s731 = scalar_lea.sflag [#allocation6], 1
    %732 = vsyncpa %s731, 1
    %733 = vsyncpa [#allocation4], 1
    %s734 = scalar_lea.sflag [#allocation4], 1
    %735 = vsyncpa %s734, 1

</llo_original>
